<compile_context>
chip_gen: v7x
topology: tpu7x:2x2x1
jax: 0.10.0
libtpu: 0.0.40
codegen_flags: <defaults>
</compile_context>

<pallas_src>
import functools

import jax
import jax.numpy as jnp
from jax.experimental import pallas as pl
from jax.experimental.pallas import tpu as pltpu

LANE = 128     # pad every feature dim to the lane width
SUBLANE = 8    # pad the node dim to the f32 sublane width


def _round_up(x, m):
    return ((x + m - 1) // m) * m


def _pad2d(x, rows, cols):
    return jnp.pad(x, ((0, rows - x.shape[0]), (0, cols - x.shape[1])))


# ---------------------------------------------------------------------------
# Fused Pallas kernel
#   adj_ref : (Np, Np)        pre-normalized (mean) or raw (sum) adjacency
#   x_ref   : (Np, LANE)      zero-padded node features
#   w_ref   : (L, LANE, LANE) stacked, zero-padded layer weights (last = fc_last)
#   b_ref   : (L, 1, LANE)    stacked, zero-padded biases
#   o_ref   : (Np, LANE)      lane-dense output block
# ---------------------------------------------------------------------------
def fused_gnn_kernel(adj_ref, x_ref, w_ref, b_ref, o_ref, *, num_gnn_layers):
    adj = adj_ref[...]
    h = x_ref[...]
    # static unroll: h stays resident in VMEM/vregs between layers
    for l in range(num_gnn_layers):
        agg = jnp.dot(adj, h, preferred_element_type=jnp.float32)
        h = jnp.maximum(
            jnp.dot(h + agg, w_ref[l], preferred_element_type=jnp.float32)
            + b_ref[l],
            0.0,
        )
    out = (jnp.dot(h, w_ref[num_gnn_layers], preferred_element_type=jnp.float32)
           + b_ref[num_gnn_layers])
    o_ref[...] = out.astype(o_ref.dtype)


# ---------------------------------------------------------------------------
# Python wrapper: adjacency build + normalization + padding + one pallas_call
# ---------------------------------------------------------------------------
def custom_layer_model(x, edge_index, layer_params, last_params,
                       aggregation="mean", output_type="node"):
    n, _ = x.shape
    n_pad = max(_round_up(n, SUBLANE), SUBLANE)

    # dense symmetric 0/1 adjacency (matches Layer.get_adjacency)
    adj = jnp.zeros((n, n), jnp.float32)
    adj = adj.at[edge_index[0], edge_index[1]].set(1.0)
    adj = adj.at[edge_index[1], edge_index[0]].set(1.0)

    if aggregation == "mean":
        # loop-invariant pre-normalization; zero-degree rows stay all-zero,
        # reproducing the "no neighbors -> zero aggregate" torch behavior
        deg = jnp.sum(adj, axis=1, keepdims=True)
        adj_eff = adj * jnp.where(deg > 0.0, 1.0 / jnp.maximum(deg, 1.0), 0.0)
    elif aggregation == "sum":
        adj_eff = adj
    else:
        # TODO(synk): max/min aggregation (masked neighbor reduce) not implemented in-kernel
        raise NotImplementedError(aggregation)

    if output_type == "graph":
        # TODO(synk): global_add_pool (graph-level readout) not implemented; using 'node'
        pass

    w_last, b_last = last_params
    out_features = w_last.shape[1]

    # zero-pad to a 128-dense lane axis and stack per-layer params
    adj_pad = _pad2d(adj_eff, n_pad, n_pad)
    x_pad = _pad2d(x, n_pad, LANE)
    w_stack = jnp.stack([_pad2d(w, LANE, LANE) for (w, _) in layer_params]
                        + [_pad2d(w_last, LANE, LANE)])
    b_stack = jnp.stack([_pad2d(b, 1, LANE) for (_, b) in layer_params]
                        + [_pad2d(b_last, 1, LANE)])

    kernel = functools.partial(fused_gnn_kernel,
                               num_gnn_layers=len(layer_params))
    vmem = pl.BlockSpec(memory_space=pltpu.MemorySpace.VMEM)
    out_pad = pl.pallas_call(
        kernel,
        out_shape=jax.ShapeDtypeStruct((n_pad, LANE), jnp.float32),
        in_specs=[vmem, vmem, vmem, vmem],
        out_specs=vmem,
    )(adj_pad, x_pad, w_stack, b_stack)
    return out_pad[:n, :out_features]


# ---------------------------------------------------------------------------
# Parameter init (mirrors nn.Linear shapes of the PyTorch module)
# ---------------------------------------------------------------------------
def init_params(key, num_features, out_features, hid_features, num_layers):
    dims = [num_features] + [hid_features] * (num_layers - 1)
    layer_params = []
    for i in range(num_layers - 1):
        key, kw, kb = jax.random.split(key, 3)
        w = 0.1 * jax.random.normal(kw, (dims[i], dims[i + 1]), jnp.float32)
        b = 0.1 * jax.random.normal(kb, (1, dims[i + 1]), jnp.float32)
        layer_params.append((w, b))
    key, kw, kb = jax.random.split(key, 3)
    w_last = 0.1 * jax.random.normal(kw, (hid_features, out_features), jnp.float32)
    b_last = 0.1 * jax.random.normal(kb, (1, out_features), jnp.float32)
    return layer_params, (w_last, b_last)


# ---------------------------------------------------------------------------
# Pure-JAX reference (mirrors the PyTorch forward) for a correctness check
# ---------------------------------------------------------------------------
def reference_model(x, edge_index, layer_params, last_params, aggregation="mean"):
    n = x.shape[0]
    adj = jnp.zeros((n, n), jnp.float32)
    adj = adj.at[edge_index[0], edge_index[1]].set(1.0)
    adj = adj.at[edge_index[1], edge_index[0]].set(1.0)
    deg = jnp.sum(adj, axis=1, keepdims=True)

    h = x
    for (w, b) in layer_params:
        agg = adj @ h
        if aggregation == "mean":
            agg = jnp.where(deg > 0.0, agg / jnp.maximum(deg, 1.0), 0.0)
        h = jnp.maximum((h + agg) @ w + b, 0.0)
    w_last, b_last = last_params
    return h @ w_last + b_last


# ---------------------------------------------------------------------------
if __name__ == "__main__":
    key = jax.random.PRNGKey(0)

    num_nodes = 8
    num_features = 16
    hid_features = 32
    out_features = 8
    num_layers = 3
    aggregation = "mean"

    key, kx = jax.random.split(key)
    x = jax.random.normal(kx, (num_nodes, num_features), jnp.float32)

    # deterministic small graph: a ring-ish path + two chords; node 7 isolated
    edge_index = jnp.array(
        [[0, 1, 2, 3, 4, 5, 0, 2],
         [1, 2, 3, 4, 5, 6, 3, 5]], dtype=jnp.int32
    )

    layer_params, last_params = init_params(
        key, num_features, out_features, hid_features, num_layers
    )

    out = custom_layer_model(x, edge_index, layer_params, last_params,
                             aggregation=aggregation, output_type="node")
    out = jax.block_until_ready(out)

    ref = reference_model(x, edge_index, layer_params, last_params, aggregation)
    assert out.shape == (num_nodes, out_features)
    assert jnp.allclose(out, ref, atol=1e-5, rtol=1e-5), "mismatch vs reference"

    # also exercise the 'sum' aggregation path through the same fused kernel
    out_sum = jax.block_until_ready(
        custom_layer_model(x, edge_index, layer_params, last_params,
                           aggregation="sum", output_type="node"))
    ref_sum = reference_model(x, edge_index, layer_params, last_params, "sum")
    assert jnp.allclose(out_sum, ref_sum, atol=1e-5, rtol=1e-5), "sum mismatch"

    print("KERNEL_OK")
</pallas_src>

<mosaic_0001>
module attributes {stable_mosaic.version = 11 : i64} {
  func.func @fused_gnn_kernel(%arg0: memref<8x8xf32, #tpu.memory_space<vmem>>, %arg1: memref<8x128xf32, #tpu.memory_space<vmem>>, %arg2: memref<3x128x128xf32, #tpu.memory_space<vmem>>, %arg3: memref<3x1x128xf32, #tpu.memory_space<vmem>>, %arg4: memref<8x128xf32, #tpu.memory_space<vmem>>) attributes {dimension_semantics = [], scalar_prefetch = 0 : i64, scratch_operands = 0 : i64, tpu.core_type = #tpu.core_type<tc>} {
    %c0 = arith.constant 0 : index
    %c0_0 = arith.constant 0 : index
    %0 = vector.load %arg0[%c0, %c0_0] : memref<8x8xf32, #tpu.memory_space<vmem>>, vector<8x8xf32>
    %c0_1 = arith.constant 0 : index
    %c0_2 = arith.constant 0 : index
    %1 = vector.load %arg1[%c0_1, %c0_2] : memref<8x128xf32, #tpu.memory_space<vmem>>, vector<8x128xf32>
    %cst = arith.constant dense<0.000000e+00> : vector<8x128xf32>
    %2 = tpu.matmul %0, %1, %cst {dimension_numbers = #tpu.dot_dimension_numbers<[1], [0], [0], [1], [0, 0, 1, 1], [], []>} : vector<8x8xf32>, vector<8x128xf32>, vector<8x128xf32> -> vector<8x128xf32>
    %3 = arith.addf %1, %2 : vector<8x128xf32>
    %c0_3 = arith.constant 0 : index
    %c0_4 = arith.constant 0 : index
    %c0_5 = arith.constant 0 : index
    %4 = vector.load %arg2[%c0_3, %c0_4, %c0_5] : memref<3x128x128xf32, #tpu.memory_space<vmem>>, vector<1x128x128xf32>
    %5 = vector.shape_cast %4 : vector<1x128x128xf32> to vector<128x128xf32>
    %cst_6 = arith.constant dense<0.000000e+00> : vector<8x128xf32>
    %6 = tpu.matmul %3, %5, %cst_6 {dimension_numbers = #tpu.dot_dimension_numbers<[1], [0], [0], [1], [0, 0, 1, 1], [], []>} : vector<8x128xf32>, vector<128x128xf32>, vector<8x128xf32> -> vector<8x128xf32>
    %c0_7 = arith.constant 0 : index
    %c0_8 = arith.constant 0 : index
    %c0_9 = arith.constant 0 : index
    %7 = vector.load %arg3[%c0_7, %c0_8, %c0_9] : memref<3x1x128xf32, #tpu.memory_space<vmem>>, vector<1x1x128xf32>
    %8 = vector.shape_cast %7 : vector<1x1x128xf32> to vector<1x128xf32>
    %9 = vector.broadcast %8 : vector<1x128xf32> to vector<8x128xf32>
    %10 = arith.addf %6, %9 : vector<8x128xf32>
    %cst_10 = arith.constant 0.000000e+00 : f32
    %11 = vector.broadcast %cst_10 : f32 to vector<8x128xf32>
    %12 = arith.maximumf %10, %11 : vector<8x128xf32>
    %cst_11 = arith.constant dense<0.000000e+00> : vector<8x128xf32>
    %13 = tpu.matmul %0, %12, %cst_11 {dimension_numbers = #tpu.dot_dimension_numbers<[1], [0], [0], [1], [0, 0, 1, 1], [], []>} : vector<8x8xf32>, vector<8x128xf32>, vector<8x128xf32> -> vector<8x128xf32>
    %14 = arith.addf %12, %13 : vector<8x128xf32>
    %c1 = arith.constant 1 : index
    %c0_12 = arith.constant 0 : index
    %c0_13 = arith.constant 0 : index
    %15 = vector.load %arg2[%c1, %c0_12, %c0_13] : memref<3x128x128xf32, #tpu.memory_space<vmem>>, vector<1x128x128xf32>
    %16 = vector.shape_cast %15 : vector<1x128x128xf32> to vector<128x128xf32>
    %cst_14 = arith.constant dense<0.000000e+00> : vector<8x128xf32>
    %17 = tpu.matmul %14, %16, %cst_14 {dimension_numbers = #tpu.dot_dimension_numbers<[1], [0], [0], [1], [0, 0, 1, 1], [], []>} : vector<8x128xf32>, vector<128x128xf32>, vector<8x128xf32> -> vector<8x128xf32>
    %c1_15 = arith.constant 1 : index
    %c0_16 = arith.constant 0 : index
    %c0_17 = arith.constant 0 : index
    %18 = vector.load %arg3[%c1_15, %c0_16, %c0_17] : memref<3x1x128xf32, #tpu.memory_space<vmem>>, vector<1x1x128xf32>
    %19 = vector.shape_cast %18 : vector<1x1x128xf32> to vector<1x128xf32>
    %20 = vector.broadcast %19 : vector<1x128xf32> to vector<8x128xf32>
    %21 = arith.addf %17, %20 : vector<8x128xf32>
    %cst_18 = arith.constant 0.000000e+00 : f32
    %22 = vector.broadcast %cst_18 : f32 to vector<8x128xf32>
    %23 = arith.maximumf %21, %22 : vector<8x128xf32>
    %c2 = arith.constant 2 : index
    %c0_19 = arith.constant 0 : index
    %c0_20 = arith.constant 0 : index
    %24 = vector.load %arg2[%c2, %c0_19, %c0_20] : memref<3x128x128xf32, #tpu.memory_space<vmem>>, vector<1x128x128xf32>
    %25 = vector.shape_cast %24 : vector<1x128x128xf32> to vector<128x128xf32>
    %cst_21 = arith.constant dense<0.000000e+00> : vector<8x128xf32>
    %26 = tpu.matmul %23, %25, %cst_21 {dimension_numbers = #tpu.dot_dimension_numbers<[1], [0], [0], [1], [0, 0, 1, 1], [], []>} : vector<8x128xf32>, vector<128x128xf32>, vector<8x128xf32> -> vector<8x128xf32>
    %c2_22 = arith.constant 2 : index
    %c0_23 = arith.constant 0 : index
    %c0_24 = arith.constant 0 : index
    %27 = vector.load %arg3[%c2_22, %c0_23, %c0_24] : memref<3x1x128xf32, #tpu.memory_space<vmem>>, vector<1x1x128xf32>
    %28 = vector.shape_cast %27 : vector<1x1x128xf32> to vector<1x128xf32>
    %29 = vector.broadcast %28 : vector<1x128xf32> to vector<8x128xf32>
    %30 = arith.addf %26, %29 : vector<8x128xf32>
    %c0_25 = arith.constant 0 : index
    %c0_26 = arith.constant 0 : index
    %31 = vector.load %arg4[%c0_25, %c0_26] : memref<8x128xf32, #tpu.memory_space<vmem>>, vector<8x128xf32>
    tpu.vector_store %arg4[%c0_25, %c0_26], %30 {strides = array<i32>} : memref<8x128xf32, #tpu.memory_space<vmem>>, vector<8x128xf32>,
    return
  }
}

</mosaic_0001>

<llo_original>
// kernel: tpu_custom_call.1
$region0: #{tpu_custom_call.1}
  #allocation0 [shape = 'u32[]', space=smem, size = 0x4, offset = 0x4, fixed_abs, tag = 'smem constant byte address 0x4 - core index']
  #allocation1 [shape = 'u32[144,128]{1,0:T(1,128)}', space=vmem, size = 0x12000, scoped, tag = 'internal scratch']
  %s0 = inlined_call_operand.hbm [shape: f32[8,8], index: 0, kind: input, shape index: {}]
  %s1 = inlined_call_operand.hbm [shape: f32[8,128], index: 1, kind: input, shape index: {}]
  %s2 = inlined_call_operand.hbm [shape: f32[3,128,128], index: 2, kind: input, shape index: {}]
  %s3 = inlined_call_operand.vmem [shape: f32[3,1,128], index: 3, kind: input, shape index: {}]
  %s4 = inlined_call_operand.hbm [shape: f32[8,128], index: 4, kind: output, shape index: {}]
  %s5 = sld [smem:[#allocation0]]
  $region38: #{tpu_custom_call.1} parent=0
    _
  %s7 = ssub.s32 1, %s5
  %s8 = scalar_select 0, %s7, %s5
  $region1: #{tpu_custom_call.1} parent=0
    #allocation2 [shape = 'u8[4096]{0}', space=vmem, size = 0x1000, scoped, tag = 'input window, operand 0, single buffered']
    #allocation3 [shape = 's32[1]{0}', space=sflag, size = 0x4, scoped, tag = 'scoped memory for tpu_custom_call.1']
    #allocation4 [shape = 's32[1]{0}', space=sflag, size = 0x4, scoped, tag = 'scoped memory for tpu_custom_call.1']
    #allocation5 [shape = 'u8[4096]{0}', space=vmem, size = 0x1000, scoped, tag = 'input window, operand 1, single buffered']
    #allocation6 [shape = 's32[1]{0}', space=sflag, size = 0x4, scoped, tag = 'scoped memory for tpu_custom_call.1']
    #allocation7 [shape = 'u8[196608]{0}', space=vmem, size = 0x30000, scoped, tag = 'input window, operand 2, single buffered']
    #allocation8 [shape = 'u8[4096]{0}', space=vmem, size = 0x1000, scoped, tag = 'output window, operand 0, single buffered']
    %9 = vsyncpa [#allocation3], 0
    %10 = vsyncpa [#allocation6], 0
    %11 = vsyncpa [#allocation4], 0
    // Predicated region
    $region2: #{tpu_custom_call.1} parent=1 // pred_check
      _
    $region3: #{tpu_custom_call.1} parent=1 // pred_check_branch
      %13 = sbr.rel (0) target = $region5
    $region4: #{tpu_custom_call.1} parent=1 // pred_region
      %s15 = ssub.s32 128, 128
      %16 = vsyncadd [#allocation3], %s15
      %s18 = sshll.u32 [#allocation2], 4
      %s19 = int_to_ptr.vmem [resolvable:$true] %s18
      %21 = dma.hbm_to_vmem [thread:$0]  %s0, 128, %s19, [#allocation3]
    $region5: #{tpu_custom_call.1} parent=1 // pred_fallthru
      _
    // Predicated region
    $region6: #{tpu_custom_call.1} parent=1 // pred_check
      _
    $region7: #{tpu_custom_call.1} parent=1 // pred_check_branch
      %23 = sbr.rel (0) target = $region9
    $region8: #{tpu_custom_call.1} parent=1 // pred_region
      %s25 = ssub.s32 128, 128
      %26 = vsyncadd [#allocation6], %s25
      %s28 = sshll.u32 [#allocation5], 4
      %s29 = int_to_ptr.vmem [resolvable:$true] %s28
      %31 = dma.hbm_to_vmem [thread:$0]  %s1, 128, %s29, [#allocation6]
    $region9: #{tpu_custom_call.1} parent=1 // pred_fallthru
      _
    // Predicated region
    $region10: #{tpu_custom_call.1} parent=1 // pred_check
      _
    $region11: #{tpu_custom_call.1} parent=1 // pred_check_branch
      %33 = sbr.rel (0) target = $region13
    $region12: #{tpu_custom_call.1} parent=1 // pred_region
      %s35 = ssub.s32 6144, 6144
      %36 = vsyncadd [#allocation6], %s35
      %s37 = sshll.u32 [#allocation7], 4
      %s38 = int_to_ptr.vmem [resolvable:$true] %s37
      %43 = dma.hbm_to_vmem [thread:$0]  %s2, 6144, %s38, [#allocation6], 128, 128, 8
    $region13: #{tpu_custom_call.1} parent=1 // pred_fallthru
      _
    // Predicated region
    $region14: #{tpu_custom_call.1} parent=1 // pred_check
      _
    $region15: #{tpu_custom_call.1} parent=1 // pred_check_branch
      %45 = sbr.rel (0) target = $region17
    $region16: #{tpu_custom_call.1} parent=1 // pred_region
      _
    $region17: #{tpu_custom_call.1} parent=1 // pred_fallthru
      _
    // Predicated region
    $region18: #{tpu_custom_call.1} parent=1 // pred_check
      _
    $region19: #{tpu_custom_call.1} parent=1 // pred_check_branch
      %47 = sbr.rel (0) target = $region21
    $region20: #{tpu_custom_call.1} parent=1 // pred_region
      %48 = dma.done [#allocation3], 128
    $region21: #{tpu_custom_call.1} parent=1 // pred_fallthru
      _
    // Predicated region
    $region22: #{tpu_custom_call.1} parent=1 // pred_check
      _
    $region23: #{tpu_custom_call.1} parent=1 // pred_check_branch
      %50 = sbr.rel (0) target = $region25
    $region24: #{tpu_custom_call.1} parent=1 // pred_region
      %51 = dma.done [#allocation6], 128
    $region25: #{tpu_custom_call.1} parent=1 // pred_fallthru
      _
    // Predicated region
    $region26: #{tpu_custom_call.1} parent=1 // pred_check
      _
    $region27: #{tpu_custom_call.1} parent=1 // pred_check_branch
      %53 = sbr.rel (0) target = $region29
    $region28: #{tpu_custom_call.1} parent=1 // pred_region
      %54 = dma.done [#allocation6], 6144
    $region29: #{tpu_custom_call.1} parent=1 // pred_fallthru
      _
    %v55 = vld [vmem:[#allocation2] sm:$0xff]
    %v56 = vld [vmem:[#allocation5] sm:$0xff]
    %vm57 = vcmask 64512
    %v59 = vsel %vm57, %v55, 0
    %61 = vmatprep.subr.mxu0 0.0
    %62 = vmatpush1.msra.mxu0 %v56
    %63 = vmatprep.subr.mxu0 0.0
    %64 = vmatpush1.msra.mxu0 0.0
    %65 = vmatprep.subr.mxu0 0.0
    %66 = vmatpush1.msra.mxu0 0.0
    %67 = vmatprep.subr.mxu0 0.0
    %68 = vmatpush1.msra.mxu0 0.0
    %69 = vmatprep.subr.mxu0 0.0
    %70 = vmatpush1.msra.mxu0 0.0
    %71 = vmatprep.subr.mxu0 0.0
    %72 = vmatpush1.msra.mxu0 0.0
    %73 = vmatprep.subr.mxu0 0.0
    %74 = vmatpush1.msra.mxu0 0.0
    %75 = vmatprep.subr.mxu0 0.0
    %76 = vmatpush1.msra.mxu0 0.0
    %77 = vmatprep.subr.mxu0 0.0
    %78 = vmatpush1.msra.mxu0 0.0
    %79 = vmatprep.subr.mxu0 0.0
    %80 = vmatpush1.msra.mxu0 0.0
    %81 = vmatprep.subr.mxu0 0.0
    %82 = vmatpush1.msra.mxu0 0.0
    %83 = vmatprep.subr.mxu0 0.0
    %84 = vmatpush1.msra.mxu0 0.0
    %85 = vmatprep.subr.mxu0 0.0
    %86 = vmatpush1.msra.mxu0 0.0
    %87 = vmatprep.subr.mxu0 0.0
    %88 = vmatpush1.msra.mxu0 0.0
    %89 = vmatprep.subr.mxu0 0.0
    %90 = vmatpush1.msra.mxu0 0.0
    %91 = vmatprep.subr.mxu0 0.0
    %92 = vmatpush1.msra.mxu0 0.0
    %93 = vmatprep.subr.mxu0 0.0
    %94 = vmatpush1.msra.mxu0 0.0
    %95 = vmatprep.subr.mxu0 0.0
    %96 = vmatpush1.msra.mxu0 0.0
    %97 = vmatprep.subr.mxu0 0.0
    %98 = vmatpush1.msra.mxu0 0.0
    %99 = vmatprep.subr.mxu0 0.0
    %100 = vmatpush1.msra.mxu0 0.0
    %101 = vmatprep.subr.mxu0 0.0
    %102 = vmatpush1.msra.mxu0 0.0
    %103 = vmatprep.subr.mxu0 0.0
    %104 = vmatpush1.msra.mxu0 0.0
    %105 = vmatprep.subr.mxu0 0.0
    %106 = vmatpush1.msra.mxu0 0.0
    %107 = vmatprep.subr.mxu0 0.0
    %108 = vmatpush1.msra.mxu0 0.0
    %109 = vmatprep.subr.mxu0 0.0
    %110 = vmatpush1.msra.mxu0 0.0
    %111 = vmatprep.subr.mxu0 0.0
    %112 = vmatpush1.msra.mxu0 0.0
    %113 = vmatprep.subr.mxu0 0.0
    %114 = vmatpush1.msra.mxu0 0.0
    %115 = vmatprep.subr.mxu0 0.0
    %116 = vmatpush1.msra.mxu0 0.0
    %117 = vmatprep.subr.mxu0 0.0
    %118 = vmatpush1.msra.mxu0 0.0
    %119 = vmatprep.subr.mxu0 0.0
    %120 = vmatpush1.msra.mxu0 0.0
    %121 = vmatprep.subr.mxu0 0.0
    %122 = vmatpush1.msra.mxu0 0.0
    %123 = vmatprep.subr.mxu0 0.0
    %124 = vmatpush1.msra.mxu0 0.0
    %125 = vmatprep.mubr.f32.mxu0 0.0
    %126 = vmatmul.mubr.f32.gmra.mrb[0].mxu0 %v59
    %v127 = vpop.f32.mrb[0].mxu0
    %v128 = vadd.f32 0.0, %v127
    %v129 = vpop.f32.mrb[0].mxu0
    %130 = vdwg.mxu0
    %v131 = vadd.f32 %v56, %v128
    %v132 = vld [vmem:[#allocation7] sm:$0xff]
    %v133 = vld [vmem:[#allocation7 + $0x8] sm:$0xff]
    %v134 = vld [vmem:[#allocation7 + $0x10] sm:$0xff]
    %v135 = vld [vmem:[#allocation7 + $0x18] sm:$0xff]
    %v136 = vld [vmem:[#allocation7 + $0x20] sm:$0xff]
    %v137 = vld [vmem:[#allocation7 + $0x28] sm:$0xff]
    %v138 = vld [vmem:[#allocation7 + $0x30] sm:$0xff]
    %v139 = vld [vmem:[#allocation7 + $0x38] sm:$0xff]
    %v140 = vld [vmem:[#allocation7 + $0x40] sm:$0xff]
    %v141 = vld [vmem:[#allocation7 + $0x48] sm:$0xff]
    %v142 = vld [vmem:[#allocation7 + $0x50] sm:$0xff]
    %v143 = vld [vmem:[#allocation7 + $0x58] sm:$0xff]
    %v144 = vld [vmem:[#allocation7 + $0x60] sm:$0xff]
    %v145 = vld [vmem:[#allocation7 + $0x68] sm:$0xff]
    %v146 = vld [vmem:[#allocation7 + $0x70] sm:$0xff]
    %v147 = vld [vmem:[#allocation7 + $0x78] sm:$0xff]
    %v148 = vld [vmem:[%s3] sm:$0x1]
    %v150 = vlaneseq
    %v151 = vshrl.u32 %v150, 7
    %v152 = vsub.s32 0, %v151
    %v153 = vrot.slane %v148, %v152
    %155 = vmatprep.subr.mxu0 0.0
    %156 = vmatpush1.msra.mxu0 %v132
    %157 = vmatprep.subr.mxu0 0.0
    %158 = vmatpush1.msra.mxu0 %v133
    %159 = vmatprep.subr.mxu0 0.0
    %160 = vmatpush1.msra.mxu0 %v134
    %161 = vmatprep.subr.mxu0 0.0
    %162 = vmatpush1.msra.mxu0 %v135
    %163 = vmatprep.subr.mxu0 0.0
    %164 = vmatpush1.msra.mxu0 %v136
    %165 = vmatprep.subr.mxu0 0.0
    %166 = vmatpush1.msra.mxu0 %v137
    %167 = vmatprep.subr.mxu0 0.0
    %168 = vmatpush1.msra.mxu0 %v138
    %169 = vmatprep.subr.mxu0 0.0
    %170 = vmatpush1.msra.mxu0 %v139
    %171 = vmatprep.subr.mxu0 0.0
    %172 = vmatpush1.msra.mxu0 %v140
    %173 = vmatprep.subr.mxu0 0.0
    %174 = vmatpush1.msra.mxu0 %v141
    %175 = vmatprep.subr.mxu0 0.0
    %176 = vmatpush1.msra.mxu0 %v142
    %177 = vmatprep.subr.mxu0 0.0
    %178 = vmatpush1.msra.mxu0 %v143
    %179 = vmatprep.subr.mxu0 0.0
    %180 = vmatpush1.msra.mxu0 %v144
    %181 = vmatprep.subr.mxu0 0.0
    %182 = vmatpush1.msra.mxu0 %v145
    %183 = vmatprep.subr.mxu0 0.0
    %184 = vmatpush1.msra.mxu0 %v146
    %185 = vmatprep.subr.mxu0 0.0
    %186 = vmatpush1.msra.mxu0 %v147
    %187 = vmatprep.subr.mxu0 0.0
    %188 = vmatpush1.msra.mxu0 0.0
    %189 = vmatprep.subr.mxu0 0.0
    %190 = vmatpush1.msra.mxu0 0.0
    %191 = vmatprep.subr.mxu0 0.0
    %192 = vmatpush1.msra.mxu0 0.0
    %193 = vmatprep.subr.mxu0 0.0
    %194 = vmatpush1.msra.mxu0 0.0
    %195 = vmatprep.subr.mxu0 0.0
    %196 = vmatpush1.msra.mxu0 0.0
    %197 = vmatprep.subr.mxu0 0.0
    %198 = vmatpush1.msra.mxu0 0.0
    %199 = vmatprep.subr.mxu0 0.0
    %200 = vmatpush1.msra.mxu0 0.0
    %201 = vmatprep.subr.mxu0 0.0
    %202 = vmatpush1.msra.mxu0 0.0
    %203 = vmatprep.subr.mxu0 0.0
    %204 = vmatpush1.msra.mxu0 0.0
    %205 = vmatprep.subr.mxu0 0.0
    %206 = vmatpush1.msra.mxu0 0.0
    %207 = vmatprep.subr.mxu0 0.0
    %208 = vmatpush1.msra.mxu0 0.0
    %209 = vmatprep.subr.mxu0 0.0
    %210 = vmatpush1.msra.mxu0 0.0
    %211 = vmatprep.subr.mxu0 0.0
    %212 = vmatpush1.msra.mxu0 0.0
    %213 = vmatprep.subr.mxu0 0.0
    %214 = vmatpush1.msra.mxu0 0.0
    %215 = vmatprep.subr.mxu0 0.0
    %216 = vmatpush1.msra.mxu0 0.0
    %217 = vmatprep.subr.mxu0 0.0
    %218 = vmatpush1.msra.mxu0 0.0
    %219 = vmatprep.mubr.f32.mxu0 0.0
    %220 = vmatmul.mubr.f32.gmra.mrb[0].mxu0 %v131
    %v221 = vpop.f32.mrb[0].mxu0
    %v222 = vadd.f32 %v153, %v221
    %v223 = vpop.f32.mrb[0].mxu0
    %224 = vdwg.mxu0
    %v225 = vmax.f32 %v222, 0.0
    %226 = vmatprep.subr.mxu0 0.0
    %227 = vmatpush1.msra.mxu0 %v225
    %228 = vmatprep.subr.mxu0 0.0
    %229 = vmatpush1.msra.mxu0 0.0
    %230 = vmatprep.subr.mxu0 0.0
    %231 = vmatpush1.msra.mxu0 0.0
    %232 = vmatprep.subr.mxu0 0.0
    %233 = vmatpush1.msra.mxu0 0.0
    %234 = vmatprep.subr.mxu0 0.0
    %235 = vmatpush1.msra.mxu0 0.0
    %236 = vmatprep.subr.mxu0 0.0
    %237 = vmatpush1.msra.mxu0 0.0
    %238 = vmatprep.subr.mxu0 0.0
    %239 = vmatpush1.msra.mxu0 0.0
    %240 = vmatprep.subr.mxu0 0.0
    %241 = vmatpush1.msra.mxu0 0.0
    %242 = vmatprep.subr.mxu0 0.0
    %243 = vmatpush1.msra.mxu0 0.0
    %244 = vmatprep.subr.mxu0 0.0
    %245 = vmatpush1.msra.mxu0 0.0
    %246 = vmatprep.subr.mxu0 0.0
    %247 = vmatpush1.msra.mxu0 0.0
    %248 = vmatprep.subr.mxu0 0.0
    %249 = vmatpush1.msra.mxu0 0.0
    %250 = vmatprep.subr.mxu0 0.0
    %251 = vmatpush1.msra.mxu0 0.0
    %252 = vmatprep.subr.mxu0 0.0
    %253 = vmatpush1.msra.mxu0 0.0
    %254 = vmatprep.subr.mxu0 0.0
    %255 = vmatpush1.msra.mxu0 0.0
    %256 = vmatprep.subr.mxu0 0.0
    %257 = vmatpush1.msra.mxu0 0.0
    %258 = vmatprep.subr.mxu0 0.0
    %259 = vmatpush1.msra.mxu0 0.0
    %260 = vmatprep.subr.mxu0 0.0
    %261 = vmatpush1.msra.mxu0 0.0
    %262 = vmatprep.subr.mxu0 0.0
    %263 = vmatpush1.msra.mxu0 0.0
    %264 = vmatprep.subr.mxu0 0.0
    %265 = vmatpush1.msra.mxu0 0.0
    %266 = vmatprep.subr.mxu0 0.0
    %267 = vmatpush1.msra.mxu0 0.0
    %268 = vmatprep.subr.mxu0 0.0
    %269 = vmatpush1.msra.mxu0 0.0
    %270 = vmatprep.subr.mxu0 0.0
    %271 = vmatpush1.msra.mxu0 0.0
    %272 = vmatprep.subr.mxu0 0.0
    %273 = vmatpush1.msra.mxu0 0.0
    %274 = vmatprep.subr.mxu0 0.0
    %275 = vmatpush1.msra.mxu0 0.0
    %276 = vmatprep.subr.mxu0 0.0
    %277 = vmatpush1.msra.mxu0 0.0
    %278 = vmatprep.subr.mxu0 0.0
    %279 = vmatpush1.msra.mxu0 0.0
    %280 = vmatprep.subr.mxu0 0.0
    %281 = vmatpush1.msra.mxu0 0.0
    %282 = vmatprep.subr.mxu0 0.0
    %283 = vmatpush1.msra.mxu0 0.0
    %284 = vmatprep.subr.mxu0 0.0
    %285 = vmatpush1.msra.mxu0 0.0
    %286 = vmatprep.subr.mxu0 0.0
    %287 = vmatpush1.msra.mxu0 0.0
    %288 = vmatprep.subr.mxu0 0.0
    %289 = vmatpush1.msra.mxu0 0.0
    %290 = vmatprep.mubr.f32.mxu0 0.0
    %291 = vmatmul.mubr.f32.gmra.mrb[0].mxu0 %v59
    %v292 = vpop.f32.mrb[0].mxu0
    %v293 = vadd.f32 0.0, %v292
    %v294 = vpop.f32.mrb[0].mxu0
    %295 = vdwg.mxu0
    %v296 = vadd.f32 %v225, %v293
    %s297 = scalar_lea.vmem [#allocation7], 128
    %v298 = vld [vmem:[%s297] sm:$0xff]
    %v299 = vld [vmem:[%s297 + $0x8] sm:$0xff]
    %v300 = vld [vmem:[%s297 + $0x10] sm:$0xff]
    %v301 = vld [vmem:[%s297 + $0x18] sm:$0xff]
    %v302 = vld [vmem:[%s297 + $0x20] sm:$0xff]
    %v303 = vld [vmem:[%s297 + $0x28] sm:$0xff]
    %v304 = vld [vmem:[%s297 + $0x30] sm:$0xff]
    %v305 = vld [vmem:[%s297 + $0x38] sm:$0xff]
    %v306 = vld [vmem:[%s297 + $0x40] sm:$0xff]
    %v307 = vld [vmem:[%s297 + $0x48] sm:$0xff]
    %v308 = vld [vmem:[%s297 + $0x50] sm:$0xff]
    %v309 = vld [vmem:[%s297 + $0x58] sm:$0xff]
    %v310 = vld [vmem:[%s297 + $0x60] sm:$0xff]
    %v311 = vld [vmem:[%s297 + $0x68] sm:$0xff]
    %v312 = vld [vmem:[%s297 + $0x70] sm:$0xff]
    %v313 = vld [vmem:[%s297 + $0x78] sm:$0xff]
    %s314 = scalar_lea.vmem %s3, 1
    %v315 = vld [vmem:[%s314] sm:$0x1]
    %v317 = vlaneseq
    %v318 = vshrl.u32 %v317, 7
    %v319 = vsub.s32 0, %v318
    %v320 = vrot.slane %v315, %v319
    %322 = vmatprep.subr.mxu0 0.0
    %323 = vmatpush1.msra.mxu0 %v298
    %324 = vmatprep.subr.mxu0 0.0
    %325 = vmatpush1.msra.mxu0 %v299
    %326 = vmatprep.subr.mxu0 0.0
    %327 = vmatpush1.msra.mxu0 %v300
    %328 = vmatprep.subr.mxu0 0.0
    %329 = vmatpush1.msra.mxu0 %v301
    %330 = vmatprep.subr.mxu0 0.0
    %331 = vmatpush1.msra.mxu0 %v302
    %332 = vmatprep.subr.mxu0 0.0
    %333 = vmatpush1.msra.mxu0 %v303
    %334 = vmatprep.subr.mxu0 0.0
    %335 = vmatpush1.msra.mxu0 %v304
    %336 = vmatprep.subr.mxu0 0.0
    %337 = vmatpush1.msra.mxu0 %v305
    %338 = vmatprep.subr.mxu0 0.0
    %339 = vmatpush1.msra.mxu0 %v306
    %340 = vmatprep.subr.mxu0 0.0
    %341 = vmatpush1.msra.mxu0 %v307
    %342 = vmatprep.subr.mxu0 0.0
    %343 = vmatpush1.msra.mxu0 %v308
    %344 = vmatprep.subr.mxu0 0.0
    %345 = vmatpush1.msra.mxu0 %v309
    %346 = vmatprep.subr.mxu0 0.0
    %347 = vmatpush1.msra.mxu0 %v310
    %348 = vmatprep.subr.mxu0 0.0
    %349 = vmatpush1.msra.mxu0 %v311
    %350 = vmatprep.subr.mxu0 0.0
    %351 = vmatpush1.msra.mxu0 %v312
    %352 = vmatprep.subr.mxu0 0.0
    %353 = vmatpush1.msra.mxu0 %v313
    %354 = vmatprep.subr.mxu0 0.0
    %355 = vmatpush1.msra.mxu0 0.0
    %356 = vmatprep.subr.mxu0 0.0
    %357 = vmatpush1.msra.mxu0 0.0
    %358 = vmatprep.subr.mxu0 0.0
    %359 = vmatpush1.msra.mxu0 0.0
    %360 = vmatprep.subr.mxu0 0.0
    %361 = vmatpush1.msra.mxu0 0.0
    %362 = vmatprep.subr.mxu0 0.0
    %363 = vmatpush1.msra.mxu0 0.0
    %364 = vmatprep.subr.mxu0 0.0
    %365 = vmatpush1.msra.mxu0 0.0
    %366 = vmatprep.subr.mxu0 0.0
    %367 = vmatpush1.msra.mxu0 0.0
    %368 = vmatprep.subr.mxu0 0.0
    %369 = vmatpush1.msra.mxu0 0.0
    %370 = vmatprep.subr.mxu0 0.0
    %371 = vmatpush1.msra.mxu0 0.0
    %372 = vmatprep.subr.mxu0 0.0
    %373 = vmatpush1.msra.mxu0 0.0
    %374 = vmatprep.subr.mxu0 0.0
    %375 = vmatpush1.msra.mxu0 0.0
    %376 = vmatprep.subr.mxu0 0.0
    %377 = vmatpush1.msra.mxu0 0.0
    %378 = vmatprep.subr.mxu0 0.0
    %379 = vmatpush1.msra.mxu0 0.0
    %380 = vmatprep.subr.mxu0 0.0
    %381 = vmatpush1.msra.mxu0 0.0
    %382 = vmatprep.subr.mxu0 0.0
    %383 = vmatpush1.msra.mxu0 0.0
    %384 = vmatprep.subr.mxu0 0.0
    %385 = vmatpush1.msra.mxu0 0.0
    %386 = vmatprep.mubr.f32.mxu0 0.0
    %387 = vmatmul.mubr.f32.gmra.mrb[0].mxu0 %v296
    %v388 = vpop.f32.mrb[0].mxu0
    %v389 = vadd.f32 %v320, %v388
    %v390 = vpop.f32.mrb[0].mxu0
    %391 = vdwg.mxu0
    %v392 = vmax.f32 %v389, 0.0
    %s393 = scalar_lea.vmem [#allocation7], 256
    %v394 = vld [vmem:[%s393] sm:$0xff]
    %v395 = vld [vmem:[%s393 + $0x8] sm:$0xff]
    %v396 = vld [vmem:[%s393 + $0x10] sm:$0xff]
    %v397 = vld [vmem:[%s393 + $0x18] sm:$0xff]
    %v398 = vld [vmem:[%s393 + $0x20] sm:$0xff]
    %v399 = vld [vmem:[%s393 + $0x28] sm:$0xff]
    %v400 = vld [vmem:[%s393 + $0x30] sm:$0xff]
    %v401 = vld [vmem:[%s393 + $0x38] sm:$0xff]
    %v402 = vld [vmem:[%s393 + $0x40] sm:$0xff]
    %v403 = vld [vmem:[%s393 + $0x48] sm:$0xff]
    %v404 = vld [vmem:[%s393 + $0x50] sm:$0xff]
    %v405 = vld [vmem:[%s393 + $0x58] sm:$0xff]
    %v406 = vld [vmem:[%s393 + $0x60] sm:$0xff]
    %v407 = vld [vmem:[%s393 + $0x68] sm:$0xff]
    %v408 = vld [vmem:[%s393 + $0x70] sm:$0xff]
    %v409 = vld [vmem:[%s393 + $0x78] sm:$0xff]
    %s410 = scalar_lea.vmem %s3, 2
    %v411 = vld [vmem:[%s410] sm:$0x1]
    %v413 = vlaneseq
    %v414 = vshrl.u32 %v413, 7
    %v415 = vsub.s32 0, %v414
    %v416 = vrot.slane %v411, %v415
    %418 = vmatprep.subr.mxu0 0.0
    %419 = vmatpush1.msra.mxu0 %v394
    %420 = vmatprep.subr.mxu0 0.0
    %421 = vmatpush1.msra.mxu0 %v395
    %422 = vmatprep.subr.mxu0 0.0
    %423 = vmatpush1.msra.mxu0 %v396
    %424 = vmatprep.subr.mxu0 0.0
    %425 = vmatpush1.msra.mxu0 %v397
    %426 = vmatprep.subr.mxu0 0.0
    %427 = vmatpush1.msra.mxu0 %v398
    %428 = vmatprep.subr.mxu0 0.0
    %429 = vmatpush1.msra.mxu0 %v399
    %430 = vmatprep.subr.mxu0 0.0
    %431 = vmatpush1.msra.mxu0 %v400
    %432 = vmatprep.subr.mxu0 0.0
    %433 = vmatpush1.msra.mxu0 %v401
    %434 = vmatprep.subr.mxu0 0.0
    %435 = vmatpush1.msra.mxu0 %v402
    %436 = vmatprep.subr.mxu0 0.0
    %437 = vmatpush1.msra.mxu0 %v403
    %438 = vmatprep.subr.mxu0 0.0
    %439 = vmatpush1.msra.mxu0 %v404
    %440 = vmatprep.subr.mxu0 0.0
    %441 = vmatpush1.msra.mxu0 %v405
    %442 = vmatprep.subr.mxu0 0.0
    %443 = vmatpush1.msra.mxu0 %v406
    %444 = vmatprep.subr.mxu0 0.0
    %445 = vmatpush1.msra.mxu0 %v407
    %446 = vmatprep.subr.mxu0 0.0
    %447 = vmatpush1.msra.mxu0 %v408
    %448 = vmatprep.subr.mxu0 0.0
    %449 = vmatpush1.msra.mxu0 %v409
    %450 = vmatprep.subr.mxu0 0.0
    %451 = vmatpush1.msra.mxu0 0.0
    %452 = vmatprep.subr.mxu0 0.0
    %453 = vmatpush1.msra.mxu0 0.0
    %454 = vmatprep.subr.mxu0 0.0
    %455 = vmatpush1.msra.mxu0 0.0
    %456 = vmatprep.subr.mxu0 0.0
    %457 = vmatpush1.msra.mxu0 0.0
    %458 = vmatprep.subr.mxu0 0.0
    %459 = vmatpush1.msra.mxu0 0.0
    %460 = vmatprep.subr.mxu0 0.0
    %461 = vmatpush1.msra.mxu0 0.0
    %462 = vmatprep.subr.mxu0 0.0
    %463 = vmatpush1.msra.mxu0 0.0
    %464 = vmatprep.subr.mxu0 0.0
    %465 = vmatpush1.msra.mxu0 0.0
    %466 = vmatprep.subr.mxu0 0.0
    %467 = vmatpush1.msra.mxu0 0.0
    %468 = vmatprep.subr.mxu0 0.0
    %469 = vmatpush1.msra.mxu0 0.0
    %470 = vmatprep.subr.mxu0 0.0
    %471 = vmatpush1.msra.mxu0 0.0
    %472 = vmatprep.subr.mxu0 0.0
    %473 = vmatpush1.msra.mxu0 0.0
    %474 = vmatprep.subr.mxu0 0.0
    %475 = vmatpush1.msra.mxu0 0.0
    %476 = vmatprep.subr.mxu0 0.0
    %477 = vmatpush1.msra.mxu0 0.0
    %478 = vmatprep.subr.mxu0 0.0
    %479 = vmatpush1.msra.mxu0 0.0
    %480 = vmatprep.subr.mxu0 0.0
    %481 = vmatpush1.msra.mxu0 0.0
    %482 = vmatprep.mubr.f32.mxu0 0.0
    %483 = vmatmul.mubr.f32.gmra.mrb[0].mxu0 %v392
    %v484 = vpop.f32.mrb[0].mxu0
    %v485 = vadd.f32 %v416, %v484
    %v486 = vpop.f32.mrb[0].mxu0
    %487 = vdwg.mxu0
    %488 = vst [vmem:[#allocation8] sm:$0xff] %v485
    // Predicated region
    $region30: #{tpu_custom_call.1} parent=1 // pred_check
      _
    $region31: #{tpu_custom_call.1} parent=1 // pred_check_branch
      %490 = sbr.rel (0) target = $region33
    $region32: #{tpu_custom_call.1} parent=1 // pred_region
      %s492 = ssub.s32 128, 128
      %493 = vsyncadd [#allocation4], %s492
      %s495 = sshll.u32 [#allocation8], 4
      %s496 = int_to_ptr.vmem [resolvable:$true] %s495
      %498 = dma.vmem_to_hbm [thread:$0]  %s496, 128, %s4, [#allocation4]
    $region33: #{tpu_custom_call.1} parent=1 // pred_fallthru
      _
    // Predicated region
    $region34: #{tpu_custom_call.1} parent=1 // pred_check
      _
    $region35: #{tpu_custom_call.1} parent=1 // pred_check_branch
      %500 = sbr.rel (0) target = $region37
    $region36: #{tpu_custom_call.1} parent=1 // pred_region
      %501 = dma.done [#allocation4], 128
    $region37: #{tpu_custom_call.1} parent=1 // pred_fallthru
      _
    %502 = vsyncpa [#allocation3], 1
    %503 = vsyncpa [#allocation6], 1
    %504 = vsyncpa [#allocation4], 1

</llo_original>
